<compile_context>
chip_gen: v5e
topology: v5e:2x2
jax: 0.10.0
libtpu: 0.0.40
codegen_flags: <defaults>
</compile_context>

<pallas_src>
import functools

import jax
import jax.numpy as jnp
from jax.experimental import pallas as pl
from jax.experimental.pallas import tpu as pltpu

LANE = 128
NEG_BIG = -1e9

# Single-buffer invariant inputs when pl.Buffered is available; the __main__
# fallback flips this off if the installed jax rejects pipeline_mode.
_SINGLE_BUFFER = [hasattr(pl, "Buffered")]


def _round_up(x, m):
    return (x + m - 1) // m * m


def _spec(shape, index_map, invariant=False):
    """BlockSpec helper; invariant blocks (constant index_map) are single-buffered."""
    if invariant and _SINGLE_BUFFER[0]:
        return pl.BlockSpec(shape, index_map, pipeline_mode=pl.Buffered(1))
    return pl.BlockSpec(shape, index_map)


def _compiler_params(vmem_limit_bytes):
    return pltpu.CompilerParams(
        dimension_semantics=("parallel",),
        vmem_limit_bytes=vmem_limit_bytes,
    )


def _chip_config(n):
    """Generation-specific tiling.

    v5e/v6e: 128 MiB physical VMEM -> stream big dst tiles under a ~96 MiB
    scoped limit. v7x: 64 MiB/TC -> conservative VMEM, smaller tiles, and try
    to give the 'parallel' grid axis >= 2 steps so both TensorCores get work.
    """
    try:
        kind = jax.devices()[0].device_kind.lower()
    except Exception:  # pragma: no cover - CPU fallback path
        kind = ""
    n128 = _round_up(max(n, 1), LANE)
    if "v7" in kind:
        vmem = 48 * 1024 * 1024
        if n128 <= 2 * LANE:
            tile = min(LANE, n128)
        else:
            tile = min(256, max(LANE, (n128 // 2) // LANE * LANE))
    else:  # v5e / v6e / unknown
        vmem = 96 * 1024 * 1024
        tile = min(512, n128)
    return tile, vmem


# -----------------------------------------------------------------------------
# Kernel 1: feature projection h = x @ W (bf16) and attention coefficients
#           alpha = h @ A (block-diagonal A built from att_src / att_dst)
# -----------------------------------------------------------------------------

def _project_kernel(x_ref, w_ref, a_ref, h_ref, al_ref, alt_ref, *, alt_rows):
    """x_ref: (TILE_N, F_pad) bf16, w_ref: (F_pad, D_pad) bf16, a_ref: (D_pad, LANE) bf16.

    Outputs:
      h_ref   (TILE_N, D_pad)     projected features, bf16 resident
      al_ref  (TILE_N, LANE)      alpha, row layout
                                  (col hh: src coeff, col alt_rows+hh: dst coeff)
      alt_ref (alt_rows, TILE_N)  src coefficients only, transposed layout
    """
    h32 = jnp.dot(x_ref[...], w_ref[...], preferred_element_type=jnp.float32)
    h = h32.astype(jnp.bfloat16)
    h_ref[...] = h
    alpha = jnp.dot(h, a_ref[...], preferred_element_type=jnp.float32)  # (TILE_N, LANE)
    al_ref[...] = alpha
    # Only the src-coefficient columns (0..heads-1) are needed transposed.
    alt_ref[...] = alpha.T[:alt_rows, :]


def gat_project(x_pad, w_pad, a_pad, *, alt_rows, tile_n, vmem_limit):
    n_pad, f_pad = x_pad.shape
    d_pad = w_pad.shape[1]
    grid = (n_pad // tile_n,)
    kernel = functools.partial(_project_kernel, alt_rows=alt_rows)
    return pl.pallas_call(
        kernel,
        out_shape=(
            jax.ShapeDtypeStruct((n_pad, d_pad), jnp.bfloat16),    # h (bf16 resident)
            jax.ShapeDtypeStruct((n_pad, LANE), jnp.float32),      # alpha, row layout
            jax.ShapeDtypeStruct((alt_rows, n_pad), jnp.float32),  # alpha_src, transposed
        ),
        grid=grid,
        in_specs=[
            _spec((tile_n, f_pad), lambda i: (i, 0)),
            _spec((f_pad, d_pad), lambda i: (0, 0), invariant=True),
            _spec((d_pad, LANE), lambda i: (0, 0), invariant=True),
        ],
        out_specs=(
            pl.BlockSpec((tile_n, d_pad), lambda i: (i, 0)),
            pl.BlockSpec((tile_n, LANE), lambda i: (i, 0)),
            pl.BlockSpec((alt_rows, tile_n), lambda i: (0, i)),
        ),
        compiler_params=_compiler_params(vmem_limit),
    )(x_pad, w_pad, a_pad)


# -----------------------------------------------------------------------------
# Kernel 2: masked attention softmax + aggregation + fused epilogue
# -----------------------------------------------------------------------------

def _attention_kernel(alpha_d_ref, alpha_t_ref, h_ref, mask_ref, bias_ref, out_ref,
                      acc_ref, *, heads, hid, alt_rows, negative_slope,
                      epilogue, elu_alpha, valid_cols):
    """One dst-row tile of a GATConv layer (dense-adjacency formulation).

    alpha_d_ref: (TILE_N, LANE)     alpha rows of the dst tile (dst coeff at col alt_rows+hh)
    alpha_t_ref: (alt_rows, N_pad)  src coefficients of ALL source nodes (transposed)
    h_ref:       (N_pad, D_pad)     projected features of ALL source nodes, bf16
    mask_ref:    (TILE_N, N_pad)    int8, mask[i, j] = 1 iff edge j -> i (incl. self loops)
    bias_ref:    (1, D_pad)
    out_ref:     (TILE_N, D_pad)    lane-dense output block (single HBM store)
    acc_ref:     (TILE_N, D_pad)    f32 VMEM accumulator
    """
    # TODO(synk): for very large graphs, add a second "arbitrary" src-tile grid
    # axis with online softmax so VMEM stops scaling with N_pad.

    # 0/1 multiplicative mask, built once per dst tile (applied after exp).
    mask_f = mask_ref[...].astype(jnp.float32)                    # (TILE_N, N_pad)

    acc_ref[...] = jnp.zeros_like(acc_ref)
    h = h_ref[...]                                                # (N_pad, D_pad) bf16

    for hh in range(heads):
        # Per-head ref slices (no big value materialization besides e/p).
        c = alt_rows + hh
        a_d = alpha_d_ref[:, c:c + 1]                             # (TILE_N, 1) dst coeff
        a_s = alpha_t_ref[hh:hh + 1, :]                           # (1, N_pad)  src coeff
        e = a_d + a_s                                             # (TILE_N, N_pad)
        e = jnp.maximum(e, negative_slope * e)                    # LeakyReLU(0.2), 2 VPU ops
        m = jnp.max(e, axis=-1, keepdims=True)                    # unmasked max: valid stabilizer
        p = jnp.exp(e - m) * mask_f                               # mask non-edges (1 mul)
        # Padded dst rows have an all-zero mask row -> denom 0; clamp so they
        # produce finite zeros (they are masked as sources downstream and
        # sliced from the final output).
        denom = jnp.maximum(jnp.sum(p, axis=-1, keepdims=True), 1e-30)
        inv = pl.reciprocal(denom, approx=True)
        # Full-width matmul (MXU pads RHS lanes anyway); keep only this head's
        # hid columns. Result written immediately -> bounded live ranges.
        prod = jnp.dot(p.astype(jnp.bfloat16), h, preferred_element_type=jnp.float32)
        lo = hh * hid
        acc_ref[:, lo:lo + hid] = prod[:, lo:lo + hid] * inv

    val = acc_ref[...] + bias_ref[...]                            # broadcast (1, D_pad) bias

    if epilogue == "elu":
        neg = elu_alpha * (jnp.exp(jnp.minimum(val, 0.0)) - 1.0)
        val = jnp.where(val > 0, val, neg)
    elif epilogue == "log_softmax":
        col = jax.lax.broadcasted_iota(jnp.int32, val.shape, 1)
        val = jnp.where(col < valid_cols, val, NEG_BIG)           # ignore pad columns
        mx = jnp.max(val, axis=-1, keepdims=True)
        s = val - mx
        lse = jnp.log(jnp.sum(jnp.exp(s), axis=-1, keepdims=True))
        val = s - lse

    out_ref[...] = val.astype(out_ref.dtype)                      # single lane-dense store


def gat_aggregate(alpha, alpha_t, h, mask_i8, bias_pad, *, heads, hid, alt_rows,
                  d_pad, negative_slope, epilogue, elu_alpha, valid_cols,
                  out_dtype, tile_n, vmem_limit):
    n_pad = h.shape[0]
    grid = (n_pad // tile_n,)
    kernel = functools.partial(
        _attention_kernel, heads=heads, hid=hid, alt_rows=alt_rows,
        negative_slope=negative_slope, epilogue=epilogue,
        elu_alpha=elu_alpha, valid_cols=valid_cols)
    return pl.pallas_call(
        kernel,
        out_shape=jax.ShapeDtypeStruct((n_pad, d_pad), out_dtype),
        grid=grid,
        in_specs=[
            _spec((tile_n, LANE), lambda i: (i, 0)),                    # alpha rows (dst tile)
            _spec((alt_rows, n_pad), lambda i: (0, 0), invariant=True), # src coeffs (all src)
            _spec((n_pad, d_pad), lambda i: (0, 0), invariant=True),    # h, bf16 (all src)
            _spec((tile_n, n_pad), lambda i: (i, 0)),                   # int8 mask row block
            _spec((1, d_pad), lambda i: (0, 0), invariant=True),        # bias
        ],
        out_specs=pl.BlockSpec((tile_n, d_pad), lambda i: (i, 0)),
        scratch_shapes=[pltpu.VMEM((tile_n, d_pad), jnp.float32)],
        compiler_params=_compiler_params(vmem_limit),
    )(alpha, alpha_t, h, mask_i8, bias_pad)


# -----------------------------------------------------------------------------
# Layer / model wrappers
# -----------------------------------------------------------------------------

def gat_conv(x_pad, layer, mask_i8, *, epilogue, elu_alpha, out_dtype, tile_n,
             vmem_limit):
    h, alpha, alpha_t = gat_project(
        x_pad, layer["w"], layer["a"], alt_rows=layer["alt_rows"],
        tile_n=tile_n, vmem_limit=vmem_limit)
    return gat_aggregate(
        alpha, alpha_t, h, mask_i8, layer["b"],
        heads=layer["heads"], hid=layer["hid"], alt_rows=layer["alt_rows"],
        d_pad=layer["d_pad"], negative_slope=0.2, epilogue=epilogue,
        elu_alpha=elu_alpha, valid_cols=layer["heads"] * layer["hid"],
        out_dtype=out_dtype, tile_n=tile_n, vmem_limit=vmem_limit)


def gat_forward(x, mask_i8, layers, *, elu_alpha, n, nclass, tile_n, vmem_limit):
    """conv1 -> dropout(eval: id) -> elu(alpha) -> conv2 -> log_softmax (fused)."""
    n_pad = mask_i8.shape[0]
    f_in_pad = layers[0]["w"].shape[0]
    x_pad = _pad_to(x.astype(jnp.float32), (n_pad, f_in_pad)).astype(jnp.bfloat16)
    h1 = gat_conv(x_pad, layers[0], mask_i8, epilogue="elu", elu_alpha=elu_alpha,
                  out_dtype=jnp.bfloat16, tile_n=tile_n, vmem_limit=vmem_limit)
    # F.dropout(x, p, training=False) -> identity (eval mode)
    out = gat_conv(h1, layers[1], mask_i8, epilogue="log_softmax",
                   elu_alpha=elu_alpha, out_dtype=jnp.float32,
                   tile_n=tile_n, vmem_limit=vmem_limit)
    return out[:n, :nclass]


# -----------------------------------------------------------------------------
# Parameter prep (padding + block-diagonal attention matrix, bf16 residents)
# -----------------------------------------------------------------------------

def _pad_to(arr, shape):
    pads = [(0, t - s) for s, t in zip(arr.shape, shape)]
    return jnp.pad(arr, pads)


def prepare_layer(w, att_src, att_dst, bias, *, heads, hid, f_in_pad):
    d_out = heads * hid
    d_pad = _round_up(d_out, LANE)
    alt_rows = _round_up(heads, 8)            # sublane-aligned row count for alpha_t
    assert alt_rows + heads <= LANE
    w_pad = _pad_to(w.astype(jnp.float32), (f_in_pad, d_pad)).astype(jnp.bfloat16)
    # A: (d_pad, LANE). col hh -> a_src of head hh; col alt_rows+hh -> a_dst of head hh.
    a = jnp.zeros((d_pad, LANE), jnp.float32)
    for hh in range(heads):
        a = a.at[hh * hid:(hh + 1) * hid, hh].set(att_src[hh])
        a = a.at[hh * hid:(hh + 1) * hid, alt_rows + hh].set(att_dst[hh])
    a = a.astype(jnp.bfloat16)
    b_pad = _pad_to(bias.reshape(1, -1).astype(jnp.float32), (1, d_pad))
    return {"w": w_pad, "a": a, "b": b_pad, "heads": heads, "hid": hid,
            "d_pad": d_pad, "alt_rows": alt_rows}


def _glorot(key, shape):
    fan_in, fan_out = shape[-2], shape[-1]
    limit = jnp.sqrt(6.0 / (fan_in + fan_out))
    return jax.random.uniform(key, shape, jnp.float32, -limit, limit)


def init_params(key, nfeat, nhid, nclass, nheads):
    k = jax.random.split(key, 8)
    return {
        # conv1: in=nfeat, out=nhid, heads=nheads, concat=True
        "w1": _glorot(k[0], (nfeat, nheads * nhid)),
        "as1": _glorot(k[1], (nheads, nhid)),
        "ad1": _glorot(k[2], (nheads, nhid)),
        "b1": jnp.zeros((1, nheads * nhid), jnp.float32),
        # conv2: in=nheads*nhid, out=nclass, heads=1
        "w2": _glorot(k[3], (nheads * nhid, 1 * nclass)),
        "as2": _glorot(k[4], (1, nclass)),
        "ad2": _glorot(k[5], (1, nclass)),
        "b2": jnp.zeros((1, nclass), jnp.float32),
    }


def build_dense_mask(edge_index, n, n_pad):
    """int8 mask[dst, src] = 1 for every edge src->dst, plus self loops (PyG default)."""
    mask = jnp.zeros((n_pad, n_pad), jnp.int8)
    mask = mask.at[edge_index[1], edge_index[0]].set(jnp.int8(1))
    idx = jnp.arange(n)
    mask = mask.at[idx, idx].set(jnp.int8(1))  # add_self_loops=True, real nodes only
    return mask


# -----------------------------------------------------------------------------
# Example run
# -----------------------------------------------------------------------------

if __name__ == "__main__":
    N, NFEAT, NHID, NCLASS, NHEADS = 16, 8, 8, 4, 4
    DROPOUT, ALPHA = 0.6, 0.2  # dropout unused at eval; ALPHA is the ELU alpha

    key = jax.random.PRNGKey(0)
    kx, kp, ke = jax.random.split(key, 3)

    x = jax.random.normal(kx, (N, NFEAT), jnp.float32)

    # deterministic graph: bidirectional ring + a few random chords
    ring_src = jnp.arange(N)
    ring_dst = (ring_src + 1) % N
    chords_src = jax.random.randint(ke, (8,), 0, N)
    chords_dst = (chords_src + 5) % N
    src = jnp.concatenate([ring_src, ring_dst, chords_src])
    dst = jnp.concatenate([ring_dst, ring_src, chords_dst])
    edge_index = jnp.stack([src, dst], axis=0)  # (2, E)

    TILE_N, VMEM_LIMIT = _chip_config(N)        # generation-specific tiling
    n_pad = _round_up(N, TILE_N)
    mask_i8 = build_dense_mask(edge_index, N, n_pad)

    params = init_params(kp, NFEAT, NHID, NCLASS, NHEADS)
    f_in_pad = _round_up(NFEAT, LANE)
    layer1 = prepare_layer(params["w1"], params["as1"], params["ad1"], params["b1"],
                           heads=NHEADS, hid=NHID, f_in_pad=f_in_pad)
    layer2 = prepare_layer(params["w2"], params["as2"], params["ad2"], params["b2"],
                           heads=1, hid=NCLASS, f_in_pad=layer1["d_pad"])

    def run():
        out = gat_forward(x, mask_i8, [layer1, layer2], elu_alpha=ALPHA,
                          n=N, nclass=NCLASS, tile_n=TILE_N, vmem_limit=VMEM_LIMIT)
        return jax.block_until_ready(out)

    try:
        out = run()
    except Exception:
        # Fallback for jax versions whose TPU pipeline rejects single-buffered
        # (pipeline_mode=pl.Buffered(1)) invariant inputs.
        _SINGLE_BUFFER[0] = False
        out = run()

    assert out.shape == (N, NCLASS)
    assert bool(jnp.all(jnp.isfinite(out)))
    # log_softmax rows must (approximately) normalize to 1.
    assert bool(jnp.all(jnp.abs(jnp.sum(jnp.exp(out), axis=-1) - 1.0) < 2e-2))
    print("KERNEL_OK")
</pallas_src>

<mosaic_0001>
module attributes {stable_mosaic.version = 11 : i64} {
  func.func @_project_kernel(%arg0: i32, %arg1: memref<128x128xbf16, #tpu.memory_space<vmem>>, %arg2: memref<128x128xbf16, #tpu.memory_space<vmem>>, %arg3: memref<128x128xbf16, #tpu.memory_space<vmem>>, %arg4: memref<128x128xbf16, #tpu.memory_space<vmem>>, %arg5: memref<128x128xf32, #tpu.memory_space<vmem>>, %arg6: memref<8x128xf32, #tpu.memory_space<vmem>>) attributes {dimension_semantics = [#tpu.dimension_semantics<parallel>], iteration_bounds = array<i64: 1>, scalar_prefetch = 0 : i64, scratch_operands = 0 : i64, tpu.core_type = #tpu.core_type<tc>, window_params = [{transform_indices = @transform_0, window_bounds = array<i64: 128, 128>}, {pipeline_mode = #tpu.pipeline_mode<synchronous>, transform_indices = @transform_1, window_bounds = array<i64: 128, 128>}, {pipeline_mode = #tpu.pipeline_mode<synchronous>, transform_indices = @transform_2, window_bounds = array<i64: 128, 128>}, {transform_indices = @transform_3, window_bounds = array<i64: 128, 128>}, {transform_indices = @transform_4, window_bounds = array<i64: 128, 128>}, {transform_indices = @transform_5, window_bounds = array<i64: 8, 128>}]} {
    %c0 = arith.constant 0 : index
    %c0_0 = arith.constant 0 : index
    %0 = vector.load %arg1[%c0, %c0_0] : memref<128x128xbf16, #tpu.memory_space<vmem>>, vector<128x128xbf16>
    %c0_1 = arith.constant 0 : index
    %c0_2 = arith.constant 0 : index
    %1 = vector.load %arg2[%c0_1, %c0_2] : memref<128x128xbf16, #tpu.memory_space<vmem>>, vector<128x128xbf16>
    %cst = arith.constant dense<0.000000e+00> : vector<128x128xf32>
    %2 = tpu.matmul %0, %1, %cst {dimension_numbers = #tpu.dot_dimension_numbers<[1], [0], [0], [1], [0, 0, 1, 1], [], []>} : vector<128x128xbf16>, vector<128x128xbf16>, vector<128x128xf32> -> vector<128x128xf32>
    %3 = arith.truncf %2 : vector<128x128xf32> to vector<128x128xbf16>
    %c0_3 = arith.constant 0 : index
    %c0_4 = arith.constant 0 : index
    %4 = vector.load %arg4[%c0_3, %c0_4] : memref<128x128xbf16, #tpu.memory_space<vmem>>, vector<128x128xbf16>
    tpu.vector_store %arg4[%c0_3, %c0_4], %3 {strides = array<i32>} : memref<128x128xbf16, #tpu.memory_space<vmem>>, vector<128x128xbf16>,
    %c0_5 = arith.constant 0 : index
    %c0_6 = arith.constant 0 : index
    %5 = vector.load %arg3[%c0_5, %c0_6] : memref<128x128xbf16, #tpu.memory_space<vmem>>, vector<128x128xbf16>
    %cst_7 = arith.constant dense<0.000000e+00> : vector<128x128xf32>
    %6 = tpu.matmul %3, %5, %cst_7 {dimension_numbers = #tpu.dot_dimension_numbers<[1], [0], [0], [1], [0, 0, 1, 1], [], []>} : vector<128x128xbf16>, vector<128x128xbf16>, vector<128x128xf32> -> vector<128x128xf32>
    %c0_8 = arith.constant 0 : index
    %c0_9 = arith.constant 0 : index
    %7 = vector.load %arg5[%c0_8, %c0_9] : memref<128x128xf32, #tpu.memory_space<vmem>>, vector<128x128xf32>
    tpu.vector_store %arg5[%c0_8, %c0_9], %6 {strides = array<i32>} : memref<128x128xf32, #tpu.memory_space<vmem>>, vector<128x128xf32>,
    %8 = tpu.transpose %6, [1, 0] : vector<128x128xf32> -> vector<128x128xf32>
    %9 = vector.extract_strided_slice %8 {offsets = [0, 0], sizes = [8, 128], strides = [1, 1]} : vector<128x128xf32> to vector<8x128xf32>
    %c0_10 = arith.constant 0 : index
    %c0_11 = arith.constant 0 : index
    %10 = vector.load %arg6[%c0_10, %c0_11] : memref<8x128xf32, #tpu.memory_space<vmem>>, vector<8x128xf32>
    tpu.vector_store %arg6[%c0_10, %c0_11], %9 {strides = array<i32>} : memref<8x128xf32, #tpu.memory_space<vmem>>, vector<8x128xf32>,
    return
  }
  func.func @transform_0(%arg0: i32) -> (i32, i32) {
    %c0_i32 = arith.constant 0 : i32
    %c0_i32_0 = arith.constant 0 : i32
    return %arg0, %c0_i32 : i32, i32
  }
  func.func @transform_1(%arg0: i32) -> (i32, i32) {
    %c0_i32 = arith.constant 0 : i32
    %c0_i32_0 = arith.constant 0 : i32
    %c0_i32_1 = arith.constant 0 : i32
    return %c0_i32, %c0_i32_0 : i32, i32
  }
  func.func @transform_2(%arg0: i32) -> (i32, i32) {
    %c0_i32 = arith.constant 0 : i32
    %c0_i32_0 = arith.constant 0 : i32
    %c0_i32_1 = arith.constant 0 : i32
    return %c0_i32, %c0_i32_0 : i32, i32
  }
  func.func @transform_3(%arg0: i32) -> (i32, i32) {
    %c0_i32 = arith.constant 0 : i32
    %c0_i32_0 = arith.constant 0 : i32
    return %arg0, %c0_i32 : i32, i32
  }
  func.func @transform_4(%arg0: i32) -> (i32, i32) {
    %c0_i32 = arith.constant 0 : i32
    %c0_i32_0 = arith.constant 0 : i32
    return %arg0, %c0_i32 : i32, i32
  }
  func.func @transform_5(%arg0: i32) -> (i32, i32) {
    %c0_i32 = arith.constant 0 : i32
    %c0_i32_0 = arith.constant 0 : i32
    return %c0_i32, %arg0 : i32, i32
  }
}

module attributes {stable_mosaic.version = 11 : i64} {
  func.func @_project_kernel(%arg0: i32, %arg1: memref<128x128xbf16, #tpu.memory_space<vmem>>, %arg2: memref<128x128xbf16, #tpu.memory_space<vmem>>, %arg3: memref<128x128xbf16, #tpu.memory_space<vmem>>, %arg4: memref<128x128xbf16, #tpu.memory_space<vmem>>, %arg5: memref<128x128xf32, #tpu.memory_space<vmem>>, %arg6: memref<8x128xf32, #tpu.memory_space<vmem>>) attributes {dimension_semantics = [#tpu.dimension_semantics<parallel>], iteration_bounds = array<i64: 1>, scalar_prefetch = 0 : i64, scratch_operands = 0 : i64, tpu.core_type = #tpu.core_type<tc>, window_params = [{transform_indices = @transform_0, window_bounds = array<i64: 128, 128>}, {pipeline_mode = #tpu.pipeline_mode<synchronous>, transform_indices = @transform_1, window_bounds = array<i64: 128, 128>}, {pipeline_mode = #tpu.pipeline_mode<synchronous>, transform_indices = @transform_2, window_bounds = array<i64: 128, 128>}, {transform_indices = @transform_3, window_bounds = array<i64: 128, 128>}, {transform_indices = @transform_4, window_bounds = array<i64: 128, 128>}, {transform_indices = @transform_5, window_bounds = array<i64: 8, 128>}]} {
    %c0 = arith.constant 0 : index
    %c0_0 = arith.constant 0 : index
    %0 = vector.load %arg1[%c0, %c0_0] : memref<128x128xbf16, #tpu.memory_space<vmem>>, vector<128x128xbf16>
    %c0_1 = arith.constant 0 : index
    %c0_2 = arith.constant 0 : index
    %1 = vector.load %arg2[%c0_1, %c0_2] : memref<128x128xbf16, #tpu.memory_space<vmem>>, vector<128x128xbf16>
    %cst = arith.constant dense<0.000000e+00> : vector<128x128xf32>
    %2 = tpu.matmul %0, %1, %cst {dimension_numbers = #tpu.dot_dimension_numbers<[1], [0], [0], [1], [0, 0, 1, 1], [], []>} : vector<128x128xbf16>, vector<128x128xbf16>, vector<128x128xf32> -> vector<128x128xf32>
    %3 = arith.truncf %2 : vector<128x128xf32> to vector<128x128xbf16>
    %c0_3 = arith.constant 0 : index
    %c0_4 = arith.constant 0 : index
    %4 = vector.load %arg4[%c0_3, %c0_4] : memref<128x128xbf16, #tpu.memory_space<vmem>>, vector<128x128xbf16>
    tpu.vector_store %arg4[%c0_3, %c0_4], %3 {strides = array<i32>} : memref<128x128xbf16, #tpu.memory_space<vmem>>, vector<128x128xbf16>,
    %c0_5 = arith.constant 0 : index
    %c0_6 = arith.constant 0 : index
    %5 = vector.load %arg3[%c0_5, %c0_6] : memref<128x128xbf16, #tpu.memory_space<vmem>>, vector<128x128xbf16>
    %cst_7 = arith.constant dense<0.000000e+00> : vector<128x128xf32>
    %6 = tpu.matmul %3, %5, %cst_7 {dimension_numbers = #tpu.dot_dimension_numbers<[1], [0], [0], [1], [0, 0, 1, 1], [], []>} : vector<128x128xbf16>, vector<128x128xbf16>, vector<128x128xf32> -> vector<128x128xf32>
    %c0_8 = arith.constant 0 : index
    %c0_9 = arith.constant 0 : index
    %7 = vector.load %arg5[%c0_8, %c0_9] : memref<128x128xf32, #tpu.memory_space<vmem>>, vector<128x128xf32>
    tpu.vector_store %arg5[%c0_8, %c0_9], %6 {strides = array<i32>} : memref<128x128xf32, #tpu.memory_space<vmem>>, vector<128x128xf32>,
    %8 = tpu.transpose %6, [1, 0] : vector<128x128xf32> -> vector<128x128xf32>
    %9 = vector.extract_strided_slice %8 {offsets = [0, 0], sizes = [8, 128], strides = [1, 1]} : vector<128x128xf32> to vector<8x128xf32>
    %c0_10 = arith.constant 0 : index
    %c0_11 = arith.constant 0 : index
    %10 = vector.load %arg6[%c0_10, %c0_11] : memref<8x128xf32, #tpu.memory_space<vmem>>, vector<8x128xf32>
    tpu.vector_store %arg6[%c0_10, %c0_11], %9 {strides = array<i32>} : memref<8x128xf32, #tpu.memory_space<vmem>>, vector<8x128xf32>,
    return
  }
  func.func @transform_0(%arg0: i32) -> (i32, i32) {
    %c0_i32 = arith.constant 0 : i32
    %c0_i32_0 = arith.constant 0 : i32
    return %arg0, %c0_i32 : i32, i32
  }
  func.func @transform_1(%arg0: i32) -> (i32, i32) {
    %c0_i32 = arith.constant 0 : i32
    %c0_i32_0 = arith.constant 0 : i32
    %c0_i32_1 = arith.constant 0 : i32
    return %c0_i32, %c0_i32_0 : i32, i32
  }
  func.func @transform_2(%arg0: i32) -> (i32, i32) {
    %c0_i32 = arith.constant 0 : i32
    %c0_i32_0 = arith.constant 0 : i32
    %c0_i32_1 = arith.constant 0 : i32
    return %c0_i32, %c0_i32_0 : i32, i32
  }
  func.func @transform_3(%arg0: i32) -> (i32, i32) {
    %c0_i32 = arith.constant 0 : i32
    %c0_i32_0 = arith.constant 0 : i32
    return %arg0, %c0_i32 : i32, i32
  }
  func.func @transform_4(%arg0: i32) -> (i32, i32) {
    %c0_i32 = arith.constant 0 : i32
    %c0_i32_0 = arith.constant 0 : i32
    return %arg0, %c0_i32 : i32, i32
  }
  func.func @transform_5(%arg0: i32) -> (i32, i32) {
    %c0_i32 = arith.constant 0 : i32
    %c0_i32_0 = arith.constant 0 : i32
    return %c0_i32, %arg0 : i32, i32
  }
}

</mosaic_0001>

<llo_original>
// kernel: tpu_custom_call.1
$region0: #{tpu_custom_call.1}
  #allocation0 [shape = 'u32[]', space=smem, size = 0x4, offset = 0x4, fixed_abs, tag = 'smem constant byte address 0x4 - core index']
  #allocation1 [shape = 'u32[72,128]{1,0:T(1,128)}', space=vmem, size = 0x9000, scoped, tag = 'internal scratch']
  %s0 = inlined_call_operand.hbm [shape: bf16[128,128], index: 0, kind: input, shape index: {}]
  %s1 = inlined_call_operand.hbm [shape: bf16[128,128], index: 1, kind: input, shape index: {}]
  %s2 = inlined_call_operand.hbm [shape: bf16[128,128], index: 2, kind: input, shape index: {}]
  %s3 = inlined_call_operand.hbm [shape: bf16[128,128], index: 3, kind: output, shape index: {0}]
  %s4 = inlined_call_operand.hbm [shape: f32[128,128], index: 4, kind: output, shape index: {1}]
  %s5 = inlined_call_operand.hbm [shape: f32[8,128], index: 5, kind: output, shape index: {2}]
  %6 = xla_tuple %s3, %s4, %s5
  %s7 = sld [smem:[#allocation0]]
  $region50: #{tpu_custom_call.1} parent=0
    _
  %s9 = ssub.s32 1, %s7
  %s10 = scalar_select 0, %s9, %s7
  $region1: #{tpu_custom_call.1} parent=0
    #allocation2 [shape = 'u8[32768]{0}', space=vmem, size = 0x8000, scoped, tag = 'input window, operand 0, single buffered']
    #allocation3 [shape = 's32[1]{0}', space=sflag, size = 0x4, scoped, tag = 'scoped memory for tpu_custom_call.1']
    #allocation4 [shape = 's32[1]{0}', space=sflag, size = 0x4, scoped, tag = 'scoped memory for tpu_custom_call.1']
    #allocation5 [shape = 'u8[32768]{0}', space=vmem, size = 0x8000, scoped, tag = 'input window, operand 1, single buffered']
    #allocation6 [shape = 's32[1]{0}', space=sflag, size = 0x4, scoped, tag = 'scoped memory for tpu_custom_call.1']
    #allocation7 [shape = 'u8[32768]{0}', space=vmem, size = 0x8000, scoped, tag = 'input window, operand 2, single buffered']
    #allocation8 [shape = 'u8[32768]{0}', space=vmem, size = 0x8000, scoped, tag = 'output window, operand 0, single buffered']
    #allocation9 [shape = 'u8[65536]{0}', space=vmem, size = 0x10000, scoped, tag = 'output window, operand 1, single buffered']
    #allocation10 [shape = 's32[1]{0}', space=sflag, size = 0x4, scoped, tag = 'scoped memory for tpu_custom_call.1']
    #allocation11 [shape = 'u8[4096]{0}', space=vmem, size = 0x1000, scoped, tag = 'output window, operand 2, single buffered']
    %11 = vsyncpa [#allocation3], 0
    %12 = vsyncpa [#allocation6], 0
    %13 = vsyncpa [#allocation4], 0
    %14 = vsyncpa [#allocation10], 0
    // Predicated region
    $region2: #{tpu_custom_call.1} parent=1 // pred_check
      _
    $region3: #{tpu_custom_call.1} parent=1 // pred_check_branch
      %16 = sbr.rel (0) target = $region5
    $region4: #{tpu_custom_call.1} parent=1 // pred_region
      %18 = vsyncadd [#allocation3], 0
      %s19 = sshll.u32 %s0, 4
      %s20 = int_to_ptr.hbm [resolvable:$true] %s19
      %s21 = sshll.u32 [#allocation2], 4
      %s22 = int_to_ptr.vmem [resolvable:$true] %s21
      %27 = dma.hbm_to_vmem [thread:$0]  %s20, 1024, %s22, [#allocation3], 64, 64, 4
    $region5: #{tpu_custom_call.1} parent=1 // pred_fallthru
      _
    // Predicated region
    $region6: #{tpu_custom_call.1} parent=1 // pred_check
      _
    $region7: #{tpu_custom_call.1} parent=1 // pred_check_branch
      %29 = sbr.rel (0) target = $region9
    $region8: #{tpu_custom_call.1} parent=1 // pred_region
      %31 = vsyncadd [#allocation6], 0
      %s32 = sshll.u32 %s1, 4
      %s33 = int_to_ptr.hbm [resolvable:$true] %s32
      %s34 = sshll.u32 [#allocation5], 4
      %s35 = int_to_ptr.vmem [resolvable:$true] %s34
      %40 = dma.hbm_to_vmem [thread:$0]  %s33, 1024, %s35, [#allocation6], 64, 64, 4
    $region9: #{tpu_custom_call.1} parent=1 // pred_fallthru
      _
    // Predicated region
    $region10: #{tpu_custom_call.1} parent=1 // pred_check
      _
    $region11: #{tpu_custom_call.1} parent=1 // pred_check_branch
      %42 = sbr.rel (0) target = $region13
    $region12: #{tpu_custom_call.1} parent=1 // pred_region
      %44 = vsyncadd [#allocation6], 0
      %s45 = sshll.u32 %s2, 4
      %s46 = int_to_ptr.hbm [resolvable:$true] %s45
      %s47 = sshll.u32 [#allocation7], 4
      %s48 = int_to_ptr.vmem [resolvable:$true] %s47
      %53 = dma.hbm_to_vmem [thread:$0]  %s46, 1024, %s48, [#allocation6], 64, 64, 4
    $region13: #{tpu_custom_call.1} parent=1 // pred_fallthru
      _
    // Predicated region
    $region14: #{tpu_custom_call.1} parent=1 // pred_check
      _
    $region15: #{tpu_custom_call.1} parent=1 // pred_check_branch
      %55 = sbr.rel (0) target = $region17
    $region16: #{tpu_custom_call.1} parent=1 // pred_region
      %57 = dma.done [#allocation3], 1024
    $region17: #{tpu_custom_call.1} parent=1 // pred_fallthru
      _
    // Predicated region
    $region18: #{tpu_custom_call.1} parent=1 // pred_check
      _
    $region19: #{tpu_custom_call.1} parent=1 // pred_check_branch
      %59 = sbr.rel (0) target = $region21
    $region20: #{tpu_custom_call.1} parent=1 // pred_region
      %61 = dma.done [#allocation6], 1024
    $region21: #{tpu_custom_call.1} parent=1 // pred_fallthru
      _
    // Predicated region
    $region22: #{tpu_custom_call.1} parent=1 // pred_check
      _
    $region23: #{tpu_custom_call.1} parent=1 // pred_check_branch
      %63 = sbr.rel (0) target = $region25
    $region24: #{tpu_custom_call.1} parent=1 // pred_region
      %65 = dma.done [#allocation6], 1024
    $region25: #{tpu_custom_call.1} parent=1 // pred_fallthru
      _
    %v66 = vld [vmem:[#allocation2] sm:$0xf]
    %v67 = vld [vmem:[#allocation2 + $0x4] sm:$0xf]
    %v68 = vld [vmem:[#allocation2 + $0x8] sm:$0xf]
    %v69 = vld [vmem:[#allocation2 + $0xc] sm:$0xf]
    %v70 = vld [vmem:[#allocation2 + $0x10] sm:$0xf]
    %v71 = vld [vmem:[#allocation2 + $0x14] sm:$0xf]
    %v72 = vld [vmem:[#allocation2 + $0x18] sm:$0xf]
    %v73 = vld [vmem:[#allocation2 + $0x1c] sm:$0xf]
    %v74 = vld [vmem:[#allocation2 + $0x20] sm:$0xf]
    %v75 = vld [vmem:[#allocation2 + $0x24] sm:$0xf]
    %v76 = vld [vmem:[#allocation2 + $0x28] sm:$0xf]
    %v77 = vld [vmem:[#allocation2 + $0x2c] sm:$0xf]
    %v78 = vld [vmem:[#allocation2 + $0x30] sm:$0xf]
    %v79 = vld [vmem:[#allocation2 + $0x34] sm:$0xf]
    %v80 = vld [vmem:[#allocation2 + $0x38] sm:$0xf]
    %v81 = vld [vmem:[#allocation2 + $0x3c] sm:$0xf]
    %v82 = vld [vmem:[#allocation5] sm:$0xf]
    %v83 = vld [vmem:[#allocation5 + $0x4] sm:$0xf]
    %v84 = vld [vmem:[#allocation5 + $0x8] sm:$0xf]
    %v85 = vld [vmem:[#allocation5 + $0xc] sm:$0xf]
    %v86 = vld [vmem:[#allocation5 + $0x10] sm:$0xf]
    %v87 = vld [vmem:[#allocation5 + $0x14] sm:$0xf]
    %v88 = vld [vmem:[#allocation5 + $0x18] sm:$0xf]
    %v89 = vld [vmem:[#allocation5 + $0x1c] sm:$0xf]
    %v90 = vld [vmem:[#allocation5 + $0x20] sm:$0xf]
    %v91 = vld [vmem:[#allocation5 + $0x24] sm:$0xf]
    %v92 = vld [vmem:[#allocation5 + $0x28] sm:$0xf]
    %v93 = vld [vmem:[#allocation5 + $0x2c] sm:$0xf]
    %v94 = vld [vmem:[#allocation5 + $0x30] sm:$0xf]
    %v95 = vld [vmem:[#allocation5 + $0x34] sm:$0xf]
    %v96 = vld [vmem:[#allocation5 + $0x38] sm:$0xf]
    %v97 = vld [vmem:[#allocation5 + $0x3c] sm:$0xf]
    %v114 = vunpack.c.l.b16 %v66
    %v115 = vunpack.c.l.b16 %v67
    %v116 = vunpack.c.l.b16 %v68
    %v117 = vunpack.c.l.b16 %v69
    %v118 = vunpack.c.l.b16 %v70
    %v119 = vunpack.c.l.b16 %v71
    %v120 = vunpack.c.l.b16 %v72
    %v121 = vunpack.c.l.b16 %v73
    %v122 = vunpack.c.l.b16 %v74
    %v123 = vunpack.c.l.b16 %v75
    %v124 = vunpack.c.l.b16 %v76
    %v125 = vunpack.c.l.b16 %v77
    %v126 = vunpack.c.l.b16 %v78
    %v127 = vunpack.c.l.b16 %v79
    %v128 = vunpack.c.l.b16 %v80
    %v129 = vunpack.c.l.b16 %v81
    %v130 = vpack.c.b16 %v115, %v114
    %v131 = vpack.c.b16 %v117, %v116
    %v132 = vpack.c.b16 %v119, %v118
    %v133 = vpack.c.b16 %v121, %v120
    %v134 = vpack.c.b16 %v123, %v122
    %v135 = vpack.c.b16 %v125, %v124
    %v136 = vpack.c.b16 %v127, %v126
    %v137 = vpack.c.b16 %v129, %v128
    %v162 = vunpack.c.l.b16 %v82
    %v163 = vunpack.c.l.b16 %v83
    %v164 = vunpack.c.l.b16 %v84
    %v165 = vunpack.c.l.b16 %v85
    %v166 = vunpack.c.l.b16 %v86
    %v167 = vunpack.c.l.b16 %v87
    %v168 = vunpack.c.l.b16 %v88
    %v169 = vunpack.c.l.b16 %v89
    %v170 = vunpack.c.l.b16 %v90
    %v171 = vunpack.c.l.b16 %v91
    %v172 = vunpack.c.l.b16 %v92
    %v173 = vunpack.c.l.b16 %v93
    %v174 = vunpack.c.l.b16 %v94
    %v175 = vunpack.c.l.b16 %v95
    %v176 = vunpack.c.l.b16 %v96
    %v177 = vunpack.c.l.b16 %v97
    %v178 = vpack.c.b16 %v163, %v162
    %v179 = vpack.c.b16 %v165, %v164
    %v180 = vpack.c.b16 %v167, %v166
    %v181 = vpack.c.b16 %v169, %v168
    %v182 = vpack.c.b16 %v171, %v170
    %v183 = vpack.c.b16 %v173, %v172
    %v184 = vpack.c.b16 %v175, %v174
    %v185 = vpack.c.b16 %v177, %v176
    %194 = vmatpush.bf16.msra.mxu0 %v185
    %195 = vmatpush.bf16.msra.mxu0 %v184
    %196 = vmatpush.bf16.msra.mxu0 %v183
    %197 = vmatpush.bf16.msra.mxu0 %v182
    %198 = vmatpush.bf16.msra.mxu0 %v181
    %199 = vmatpush.bf16.msra.mxu0 %v180
    %200 = vmatpush.bf16.msra.mxu0 %v179
    %201 = vmatpush.bf16.msra.mxu0 %v178
    %202 = vmatmul.bf16.gmra.mxu0 %v130
    %v203 = vpop.f32.mrf.mxu0
    %v204 = vadd.f32 0.0, %v203
    %v205 = vpop.f32.mrf.mxu0
    %v206 = vadd.f32 0.0, %v205
    %207 = vmatmul.bf16.gmra.mxu0 %v131
    %v208 = vpop.f32.mrf.mxu0
    %v209 = vadd.f32 0.0, %v208
    %v210 = vpop.f32.mrf.mxu0
    %v211 = vadd.f32 0.0, %v210
    %212 = vmatmul.bf16.gmra.mxu0 %v132
    %v213 = vpop.f32.mrf.mxu0
    %v214 = vadd.f32 0.0, %v213
    %v215 = vpop.f32.mrf.mxu0
    %v216 = vadd.f32 0.0, %v215
    %217 = vmatmul.bf16.gmra.mxu0 %v133
    %v218 = vpop.f32.mrf.mxu0
    %v219 = vadd.f32 0.0, %v218
    %v220 = vpop.f32.mrf.mxu0
    %v221 = vadd.f32 0.0, %v220
    %222 = vmatmul.bf16.gmra.mxu0 %v134
    %v223 = vpop.f32.mrf.mxu0
    %v224 = vadd.f32 0.0, %v223
    %v225 = vpop.f32.mrf.mxu0
    %v226 = vadd.f32 0.0, %v225
    %227 = vmatmul.bf16.gmra.mxu0 %v135
    %v228 = vpop.f32.mrf.mxu0
    %v229 = vadd.f32 0.0, %v228
    %v230 = vpop.f32.mrf.mxu0
    %v231 = vadd.f32 0.0, %v230
    %232 = vmatmul.bf16.gmra.mxu0 %v136
    %v233 = vpop.f32.mrf.mxu0
    %v234 = vadd.f32 0.0, %v233
    %v235 = vpop.f32.mrf.mxu0
    %v236 = vadd.f32 0.0, %v235
    %237 = vmatmul.bf16.gmra.mxu0 %v137
    %v238 = vpop.f32.mrf.mxu0
    %v239 = vadd.f32 0.0, %v238
    %v240 = vpop.f32.mrf.mxu0
    %v241 = vadd.f32 0.0, %v240
    %242 = vdwg.mxu0
    %v243 = vpack.c.bf16 %v204, %v204
    %v244 = vpack.c.bf16 %v206, %v206
    %v245 = vpack.c.bf16 %v209, %v209
    %v246 = vpack.c.bf16 %v211, %v211
    %v247 = vpack.c.bf16 %v214, %v214
    %v248 = vpack.c.bf16 %v216, %v216
    %v249 = vpack.c.bf16 %v219, %v219
    %v250 = vpack.c.bf16 %v221, %v221
    %v251 = vpack.c.bf16 %v224, %v224
    %v252 = vpack.c.bf16 %v226, %v226
    %v253 = vpack.c.bf16 %v229, %v229
    %v254 = vpack.c.bf16 %v231, %v231
    %v255 = vpack.c.bf16 %v234, %v234
    %v256 = vpack.c.bf16 %v236, %v236
    %v257 = vpack.c.bf16 %v239, %v239
    %v258 = vpack.c.bf16 %v241, %v241
    %259 = vst [vmem:[#allocation8] sm:$0xf] %v243
    %260 = vst [vmem:[#allocation8 + $0x4] sm:$0xf] %v244
    %261 = vst [vmem:[#allocation8 + $0x8] sm:$0xf] %v245
    %262 = vst [vmem:[#allocation8 + $0xc] sm:$0xf] %v246
    %263 = vst [vmem:[#allocation8 + $0x10] sm:$0xf] %v247
    %264 = vst [vmem:[#allocation8 + $0x14] sm:$0xf] %v248
    %265 = vst [vmem:[#allocation8 + $0x18] sm:$0xf] %v249
    %266 = vst [vmem:[#allocation8 + $0x1c] sm:$0xf] %v250
    %267 = vst [vmem:[#allocation8 + $0x20] sm:$0xf] %v251
    %268 = vst [vmem:[#allocation8 + $0x24] sm:$0xf] %v252
    %269 = vst [vmem:[#allocation8 + $0x28] sm:$0xf] %v253
    %270 = vst [vmem:[#allocation8 + $0x2c] sm:$0xf] %v254
    %271 = vst [vmem:[#allocation8 + $0x30] sm:$0xf] %v255
    %272 = vst [vmem:[#allocation8 + $0x34] sm:$0xf] %v256
    %273 = vst [vmem:[#allocation8 + $0x38] sm:$0xf] %v257
    %274 = vst [vmem:[#allocation8 + $0x3c] sm:$0xf] %v258
    %v275 = vld [vmem:[#allocation7] sm:$0xf]
    %v276 = vld [vmem:[#allocation7 + $0x4] sm:$0xf]
    %v277 = vld [vmem:[#allocation7 + $0x8] sm:$0xf]
    %v278 = vld [vmem:[#allocation7 + $0xc] sm:$0xf]
    %v279 = vld [vmem:[#allocation7 + $0x10] sm:$0xf]
    %v280 = vld [vmem:[#allocation7 + $0x14] sm:$0xf]
    %v281 = vld [vmem:[#allocation7 + $0x18] sm:$0xf]
    %v282 = vld [vmem:[#allocation7 + $0x1c] sm:$0xf]
    %v283 = vld [vmem:[#allocation7 + $0x20] sm:$0xf]
    %v284 = vld [vmem:[#allocation7 + $0x24] sm:$0xf]
    %v285 = vld [vmem:[#allocation7 + $0x28] sm:$0xf]
    %v286 = vld [vmem:[#allocation7 + $0x2c] sm:$0xf]
    %v287 = vld [vmem:[#allocation7 + $0x30] sm:$0xf]
    %v288 = vld [vmem:[#allocation7 + $0x34] sm:$0xf]
    %v289 = vld [vmem:[#allocation7 + $0x38] sm:$0xf]
    %v290 = vld [vmem:[#allocation7 + $0x3c] sm:$0xf]
    %v307 = vunpack.c.l.b16 %v243
    %v308 = vunpack.c.l.b16 %v244
    %v309 = vunpack.c.l.b16 %v245
    %v310 = vunpack.c.l.b16 %v246
    %v311 = vunpack.c.l.b16 %v247
    %v312 = vunpack.c.l.b16 %v248
    %v313 = vunpack.c.l.b16 %v249
    %v314 = vunpack.c.l.b16 %v250
    %v315 = vunpack.c.l.b16 %v251
    %v316 = vunpack.c.l.b16 %v252
    %v317 = vunpack.c.l.b16 %v253
    %v318 = vunpack.c.l.b16 %v254
    %v319 = vunpack.c.l.b16 %v255
    %v320 = vunpack.c.l.b16 %v256
    %v321 = vunpack.c.l.b16 %v257
    %v322 = vunpack.c.l.b16 %v258
    %v323 = vpack.c.b16 %v308, %v307
    %v324 = vpack.c.b16 %v310, %v309
    %v325 = vpack.c.b16 %v312, %v311
    %v326 = vpack.c.b16 %v314, %v313
    %v327 = vpack.c.b16 %v316, %v315
    %v328 = vpack.c.b16 %v318, %v317
    %v329 = vpack.c.b16 %v320, %v319
    %v330 = vpack.c.b16 %v322, %v321
    %v355 = vunpack.c.l.b16 %v275
    %v356 = vunpack.c.l.b16 %v276
    %v357 = vunpack.c.l.b16 %v277
    %v358 = vunpack.c.l.b16 %v278
    %v359 = vunpack.c.l.b16 %v279
    %v360 = vunpack.c.l.b16 %v280
    %v361 = vunpack.c.l.b16 %v281
    %v362 = vunpack.c.l.b16 %v282
    %v363 = vunpack.c.l.b16 %v283
    %v364 = vunpack.c.l.b16 %v284
    %v365 = vunpack.c.l.b16 %v285
    %v366 = vunpack.c.l.b16 %v286
    %v367 = vunpack.c.l.b16 %v287
    %v368 = vunpack.c.l.b16 %v288
    %v369 = vunpack.c.l.b16 %v289
    %v370 = vunpack.c.l.b16 %v290
    %v371 = vpack.c.b16 %v356, %v355
    %v372 = vpack.c.b16 %v358, %v357
    %v373 = vpack.c.b16 %v360, %v359
    %v374 = vpack.c.b16 %v362, %v361
    %v375 = vpack.c.b16 %v364, %v363
    %v376 = vpack.c.b16 %v366, %v365
    %v377 = vpack.c.b16 %v368, %v367
    %v378 = vpack.c.b16 %v370, %v369
    %387 = vmatpush.bf16.msra.mxu0 %v378
    %388 = vmatpush.bf16.msra.mxu0 %v377
    %389 = vmatpush.bf16.msra.mxu0 %v376
    %390 = vmatpush.bf16.msra.mxu0 %v375
    %391 = vmatpush.bf16.msra.mxu0 %v374
    %392 = vmatpush.bf16.msra.mxu0 %v373
    %393 = vmatpush.bf16.msra.mxu0 %v372
    %394 = vmatpush.bf16.msra.mxu0 %v371
    %395 = vmatmul.bf16.gmra.mxu0 %v323
    %v396 = vpop.f32.mrf.mxu0
    %v397 = vadd.f32 0.0, %v396
    %v398 = vpop.f32.mrf.mxu0
    %v399 = vadd.f32 0.0, %v398
    %400 = vmatmul.bf16.gmra.mxu0 %v324
    %v401 = vpop.f32.mrf.mxu0
    %v402 = vadd.f32 0.0, %v401
    %v403 = vpop.f32.mrf.mxu0
    %v404 = vadd.f32 0.0, %v403
    %405 = vmatmul.bf16.gmra.mxu0 %v325
    %v406 = vpop.f32.mrf.mxu0
    %v407 = vadd.f32 0.0, %v406
    %v408 = vpop.f32.mrf.mxu0
    %v409 = vadd.f32 0.0, %v408
    %410 = vmatmul.bf16.gmra.mxu0 %v326
    %v411 = vpop.f32.mrf.mxu0
    %v412 = vadd.f32 0.0, %v411
    %v413 = vpop.f32.mrf.mxu0
    %v414 = vadd.f32 0.0, %v413
    %415 = vmatmul.bf16.gmra.mxu0 %v327
    %v416 = vpop.f32.mrf.mxu0
    %v417 = vadd.f32 0.0, %v416
    %v418 = vpop.f32.mrf.mxu0
    %v419 = vadd.f32 0.0, %v418
    %420 = vmatmul.bf16.gmra.mxu0 %v328
    %v421 = vpop.f32.mrf.mxu0
    %v422 = vadd.f32 0.0, %v421
    %v423 = vpop.f32.mrf.mxu0
    %v424 = vadd.f32 0.0, %v423
    %425 = vmatmul.bf16.gmra.mxu0 %v329
    %v426 = vpop.f32.mrf.mxu0
    %v427 = vadd.f32 0.0, %v426
    %v428 = vpop.f32.mrf.mxu0
    %v429 = vadd.f32 0.0, %v428
    %430 = vmatmul.bf16.gmra.mxu0 %v330
    %v431 = vpop.f32.mrf.mxu0
    %v432 = vadd.f32 0.0, %v431
    %v433 = vpop.f32.mrf.mxu0
    %v434 = vadd.f32 0.0, %v433
    %435 = vdwg.mxu0
    %436 = vst [vmem:[#allocation9] sm:$0xff] %v397
    %437 = vst [vmem:[#allocation9 + $0x8] sm:$0xff] %v399
    %438 = vst [vmem:[#allocation9 + $0x10] sm:$0xff] %v402
    %439 = vst [vmem:[#allocation9 + $0x18] sm:$0xff] %v404
    %440 = vst [vmem:[#allocation9 + $0x20] sm:$0xff] %v407
    %441 = vst [vmem:[#allocation9 + $0x28] sm:$0xff] %v409
    %442 = vst [vmem:[#allocation9 + $0x30] sm:$0xff] %v412
    %443 = vst [vmem:[#allocation9 + $0x38] sm:$0xff] %v414
    %444 = vst [vmem:[#allocation9 + $0x40] sm:$0xff] %v417
    %445 = vst [vmem:[#allocation9 + $0x48] sm:$0xff] %v419
    %446 = vst [vmem:[#allocation9 + $0x50] sm:$0xff] %v422
    %447 = vst [vmem:[#allocation9 + $0x58] sm:$0xff] %v424
    %448 = vst [vmem:[#allocation9 + $0x60] sm:$0xff] %v427
    %449 = vst [vmem:[#allocation9 + $0x68] sm:$0xff] %v429
    %450 = vst [vmem:[#allocation9 + $0x70] sm:$0xff] %v432
    %451 = vst [vmem:[#allocation9 + $0x78] sm:$0xff] %v434
    %452 = vxpose.xlu0.b32.start [1/16] %v397, 128
    %453 = vxpose.xlu0.b32.cont [2/16] %v399, 128
    %454 = vxpose.xlu0.b32.cont [3/16] %v402, 128
    %455 = vxpose.xlu0.b32.cont [4/16] %v404, 128
    %456 = vxpose.xlu0.b32.cont [5/16] %v407, 128
    %457 = vxpose.xlu0.b32.cont [6/16] %v409, 128
    %458 = vxpose.xlu0.b32.cont [7/16] %v412, 128
    %459 = vxpose.xlu0.b32.cont [8/16] %v414, 128
    %460 = vxpose.xlu0.b32.cont [9/16] %v417, 128
    %461 = vxpose.xlu0.b32.cont [10/16] %v419, 128
    %462 = vxpose.xlu0.b32.cont [11/16] %v422, 128
    %463 = vxpose.xlu0.b32.cont [12/16] %v424, 128
    %464 = vxpose.xlu0.b32.cont [13/16] %v427, 128
    %465 = vxpose.xlu0.b32.cont [14/16] %v429, 128
    %466 = vxpose.xlu0.b32.cont [15/16] %v432, 128
    %467 = vxpose.xlu0.b32.end [16/16] %v434, 128
    %v468 = vpop.trf.xlu0
    %v469 = vpop.trf.xlu0
    %v470 = vpop.trf.xlu0
    %v471 = vpop.trf.xlu0
    %v472 = vpop.trf.xlu0
    %v473 = vpop.trf.xlu0
    %v474 = vpop.trf.xlu0
    %v475 = vpop.trf.xlu0
    %v476 = vpop.trf.xlu0
    %v477 = vpop.trf.xlu0
    %v478 = vpop.trf.xlu0
    %v479 = vpop.trf.xlu0
    %v480 = vpop.trf.xlu0
    %v481 = vpop.trf.xlu0
    %v482 = vpop.trf.xlu0
    %v483 = vpop.trf.xlu0
    %484 = vst [vmem:[#allocation11] sm:$0xff] %v468
    // Predicated region
    $region26: #{tpu_custom_call.1} parent=1 // pred_check
      _
    $region27: #{tpu_custom_call.1} parent=1 // pred_check_branch
      %486 = sbr.rel (0) target = $region29
    $region28: #{tpu_custom_call.1} parent=1 // pred_region
      %488 = vsyncadd [#allocation4], 0
      %s489 = sshll.u32 [#allocation8], 4
      %s490 = int_to_ptr.vmem [resolvable:$true] %s489
      %s491 = sshll.u32 %s3, 4
      %s492 = int_to_ptr.hbm [resolvable:$true] %s491
      %497 = dma.vmem_to_hbm [thread:$0]  %s490, 1024, %s492, [#allocation4], 64, 64, 4
    $region29: #{tpu_custom_call.1} parent=1 // pred_fallthru
      _
    // Predicated region
    $region30: #{tpu_custom_call.1} parent=1 // pred_check
      _
    $region31: #{tpu_custom_call.1} parent=1 // pred_check_branch
      %499 = sbr.rel (0) target = $region33
    $region32: #{tpu_custom_call.1} parent=1 // pred_region
      %501 = vsyncadd [#allocation10], 0
      %s502 = sshll.u32 [#allocation9], 4
      %s503 = int_to_ptr.vmem [resolvable:$true] %s502
      %s504 = sshll.u32 %s4, 4
      %s505 = int_to_ptr.hbm [resolvable:$true] %s504
      %510 = dma.vmem_to_hbm [thread:$0]  %s503, 2048, %s505, [#allocation10], 128, 128, 8
    $region33: #{tpu_custom_call.1} parent=1 // pred_fallthru
      _
    // Predicated region
    $region34: #{tpu_custom_call.1} parent=1 // pred_check
      _
    $region35: #{tpu_custom_call.1} parent=1 // pred_check_branch
      %512 = sbr.rel (0) target = $region37
    $region36: #{tpu_custom_call.1} parent=1 // pred_region
      %514 = vsyncadd [#allocation10], 0
      %s516 = sshll.u32 [#allocation11], 4
      %s517 = int_to_ptr.vmem [resolvable:$true] %s516
      %s518 = sshll.u32 %s5, 4
      %s519 = int_to_ptr.hbm [resolvable:$true] %s518
      %521 = dma.vmem_to_hbm [thread:$0]  %s517, 128, %s519, [#allocation10]
    $region37: #{tpu_custom_call.1} parent=1 // pred_fallthru
      _
    // Predicated region
    $region38: #{tpu_custom_call.1} parent=1 // pred_check
      _
    $region39: #{tpu_custom_call.1} parent=1 // pred_check_branch
      %523 = sbr.rel (0) target = $region41
    $region40: #{tpu_custom_call.1} parent=1 // pred_region
      %525 = dma.done [#allocation4], 1024
    $region41: #{tpu_custom_call.1} parent=1 // pred_fallthru
      _
    // Predicated region
    $region42: #{tpu_custom_call.1} parent=1 // pred_check
      _
    $region43: #{tpu_custom_call.1} parent=1 // pred_check_branch
      %527 = sbr.rel (0) target = $region45
    $region44: #{tpu_custom_call.1} parent=1 // pred_region
      %529 = dma.done [#allocation10], 2048
    $region45: #{tpu_custom_call.1} parent=1 // pred_fallthru
      _
    // Predicated region
    $region46: #{tpu_custom_call.1} parent=1 // pred_check
      _
    $region47: #{tpu_custom_call.1} parent=1 // pred_check_branch
      %531 = sbr.rel (0) target = $region49
    $region48: #{tpu_custom_call.1} parent=1 // pred_region
      %533 = dma.done [#allocation10], 128
    $region49: #{tpu_custom_call.1} parent=1 // pred_fallthru
      _
    %534 = vsyncpa [#allocation3], 1
    %535 = vsyncpa [#allocation6], 1
    %536 = vsyncpa [#allocation4], 1
    %537 = vsyncpa [#allocation10], 1

// kernel: tpu_custom_call.1
$region0: #{tpu_custom_call.1}
  #allocation0 [shape = 'u32[]', space=smem, size = 0x4, offset = 0x4, fixed_abs, tag = 'smem constant byte address 0x4 - core index']
  #allocation1 [shape = 'u32[72,128]{1,0:T(1,128)}', space=vmem, size = 0x9000, scoped, tag = 'internal scratch']
  %s0 = inlined_call_operand.hbm [shape: bf16[128,128], index: 0, kind: input, shape index: {}]
  %s1 = inlined_call_operand.hbm [shape: bf16[128,128], index: 1, kind: input, shape index: {}]
  %s2 = inlined_call_operand.hbm [shape: bf16[128,128], index: 2, kind: input, shape index: {}]
  %s3 = inlined_call_operand.hbm [shape: bf16[128,128], index: 3, kind: output, shape index: {0}]
  %s4 = inlined_call_operand.hbm [shape: f32[128,128], index: 4, kind: output, shape index: {1}]
  %s5 = inlined_call_operand.hbm [shape: f32[8,128], index: 5, kind: output, shape index: {2}]
  %6 = xla_tuple %s3, %s4, %s5
  %s7 = sld [smem:[#allocation0]]
  $region50: #{tpu_custom_call.1} parent=0
    _
  %s9 = ssub.s32 1, %s7
  %s10 = scalar_select 0, %s9, %s7
  $region1: #{tpu_custom_call.1} parent=0
    #allocation2 [shape = 'u8[32768]{0}', space=vmem, size = 0x8000, scoped, tag = 'input window, operand 0, single buffered']
    #allocation3 [shape = 's32[1]{0}', space=sflag, size = 0x4, scoped, tag = 'scoped memory for tpu_custom_call.1']
    #allocation4 [shape = 's32[1]{0}', space=sflag, size = 0x4, scoped, tag = 'scoped memory for tpu_custom_call.1']
    #allocation5 [shape = 'u8[32768]{0}', space=vmem, size = 0x8000, scoped, tag = 'input window, operand 1, single buffered']
    #allocation6 [shape = 's32[1]{0}', space=sflag, size = 0x4, scoped, tag = 'scoped memory for tpu_custom_call.1']
    #allocation7 [shape = 'u8[32768]{0}', space=vmem, size = 0x8000, scoped, tag = 'input window, operand 2, single buffered']
    #allocation8 [shape = 'u8[32768]{0}', space=vmem, size = 0x8000, scoped, tag = 'output window, operand 0, single buffered']
    #allocation9 [shape = 'u8[65536]{0}', space=vmem, size = 0x10000, scoped, tag = 'output window, operand 1, single buffered']
    #allocation10 [shape = 's32[1]{0}', space=sflag, size = 0x4, scoped, tag = 'scoped memory for tpu_custom_call.1']
    #allocation11 [shape = 'u8[4096]{0}', space=vmem, size = 0x1000, scoped, tag = 'output window, operand 2, single buffered']
    %11 = vsyncpa [#allocation3], 0
    %12 = vsyncpa [#allocation6], 0
    %13 = vsyncpa [#allocation4], 0
    %14 = vsyncpa [#allocation10], 0
    // Predicated region
    $region2: #{tpu_custom_call.1} parent=1 // pred_check
      _
    $region3: #{tpu_custom_call.1} parent=1 // pred_check_branch
      %16 = sbr.rel (0) target = $region5
    $region4: #{tpu_custom_call.1} parent=1 // pred_region
      %18 = vsyncadd [#allocation3], 0
      %s19 = sshll.u32 %s0, 4
      %s20 = int_to_ptr.hbm [resolvable:$true] %s19
      %s21 = sshll.u32 [#allocation2], 4
      %s22 = int_to_ptr.vmem [resolvable:$true] %s21
      %27 = dma.hbm_to_vmem [thread:$0]  %s20, 1024, %s22, [#allocation3], 64, 64, 4
    $region5: #{tpu_custom_call.1} parent=1 // pred_fallthru
      _
    // Predicated region
    $region6: #{tpu_custom_call.1} parent=1 // pred_check
      _
    $region7: #{tpu_custom_call.1} parent=1 // pred_check_branch
      %29 = sbr.rel (0) target = $region9
    $region8: #{tpu_custom_call.1} parent=1 // pred_region
      %31 = vsyncadd [#allocation6], 0
      %s32 = sshll.u32 %s1, 4
      %s33 = int_to_ptr.hbm [resolvable:$true] %s32
      %s34 = sshll.u32 [#allocation5], 4
      %s35 = int_to_ptr.vmem [resolvable:$true] %s34
      %40 = dma.hbm_to_vmem [thread:$0]  %s33, 1024, %s35, [#allocation6], 64, 64, 4
    $region9: #{tpu_custom_call.1} parent=1 // pred_fallthru
      _
    // Predicated region
    $region10: #{tpu_custom_call.1} parent=1 // pred_check
      _
    $region11: #{tpu_custom_call.1} parent=1 // pred_check_branch
      %42 = sbr.rel (0) target = $region13
    $region12: #{tpu_custom_call.1} parent=1 // pred_region
      %44 = vsyncadd [#allocation6], 0
      %s45 = sshll.u32 %s2, 4
      %s46 = int_to_ptr.hbm [resolvable:$true] %s45
      %s47 = sshll.u32 [#allocation7], 4
      %s48 = int_to_ptr.vmem [resolvable:$true] %s47
      %53 = dma.hbm_to_vmem [thread:$0]  %s46, 1024, %s48, [#allocation6], 64, 64, 4
    $region13: #{tpu_custom_call.1} parent=1 // pred_fallthru
      _
    // Predicated region
    $region14: #{tpu_custom_call.1} parent=1 // pred_check
      _
    $region15: #{tpu_custom_call.1} parent=1 // pred_check_branch
      %55 = sbr.rel (0) target = $region17
    $region16: #{tpu_custom_call.1} parent=1 // pred_region
      %57 = dma.done [#allocation3], 1024
    $region17: #{tpu_custom_call.1} parent=1 // pred_fallthru
      _
    // Predicated region
    $region18: #{tpu_custom_call.1} parent=1 // pred_check
      _
    $region19: #{tpu_custom_call.1} parent=1 // pred_check_branch
      %59 = sbr.rel (0) target = $region21
    $region20: #{tpu_custom_call.1} parent=1 // pred_region
      %61 = dma.done [#allocation6], 1024
    $region21: #{tpu_custom_call.1} parent=1 // pred_fallthru
      _
    // Predicated region
    $region22: #{tpu_custom_call.1} parent=1 // pred_check
      _
    $region23: #{tpu_custom_call.1} parent=1 // pred_check_branch
      %63 = sbr.rel (0) target = $region25
    $region24: #{tpu_custom_call.1} parent=1 // pred_region
      %65 = dma.done [#allocation6], 1024
    $region25: #{tpu_custom_call.1} parent=1 // pred_fallthru
      _
    %v66 = vld [vmem:[#allocation2] sm:$0xf]
    %v67 = vld [vmem:[#allocation2 + $0x4] sm:$0xf]
    %v68 = vld [vmem:[#allocation2 + $0x8] sm:$0xf]
    %v69 = vld [vmem:[#allocation2 + $0xc] sm:$0xf]
    %v70 = vld [vmem:[#allocation2 + $0x10] sm:$0xf]
    %v71 = vld [vmem:[#allocation2 + $0x14] sm:$0xf]
    %v72 = vld [vmem:[#allocation2 + $0x18] sm:$0xf]
    %v73 = vld [vmem:[#allocation2 + $0x1c] sm:$0xf]
    %v74 = vld [vmem:[#allocation2 + $0x20] sm:$0xf]
    %v75 = vld [vmem:[#allocation2 + $0x24] sm:$0xf]
    %v76 = vld [vmem:[#allocation2 + $0x28] sm:$0xf]
    %v77 = vld [vmem:[#allocation2 + $0x2c] sm:$0xf]
    %v78 = vld [vmem:[#allocation2 + $0x30] sm:$0xf]
    %v79 = vld [vmem:[#allocation2 + $0x34] sm:$0xf]
    %v80 = vld [vmem:[#allocation2 + $0x38] sm:$0xf]
    %v81 = vld [vmem:[#allocation2 + $0x3c] sm:$0xf]
    %v82 = vld [vmem:[#allocation5] sm:$0xf]
    %v83 = vld [vmem:[#allocation5 + $0x4] sm:$0xf]
    %v84 = vld [vmem:[#allocation5 + $0x8] sm:$0xf]
    %v85 = vld [vmem:[#allocation5 + $0xc] sm:$0xf]
    %v86 = vld [vmem:[#allocation5 + $0x10] sm:$0xf]
    %v87 = vld [vmem:[#allocation5 + $0x14] sm:$0xf]
    %v88 = vld [vmem:[#allocation5 + $0x18] sm:$0xf]
    %v89 = vld [vmem:[#allocation5 + $0x1c] sm:$0xf]
    %v90 = vld [vmem:[#allocation5 + $0x20] sm:$0xf]
    %v91 = vld [vmem:[#allocation5 + $0x24] sm:$0xf]
    %v92 = vld [vmem:[#allocation5 + $0x28] sm:$0xf]
    %v93 = vld [vmem:[#allocation5 + $0x2c] sm:$0xf]
    %v94 = vld [vmem:[#allocation5 + $0x30] sm:$0xf]
    %v95 = vld [vmem:[#allocation5 + $0x34] sm:$0xf]
    %v96 = vld [vmem:[#allocation5 + $0x38] sm:$0xf]
    %v97 = vld [vmem:[#allocation5 + $0x3c] sm:$0xf]
    %v114 = vunpack.c.l.b16 %v66
    %v115 = vunpack.c.l.b16 %v67
    %v116 = vunpack.c.l.b16 %v68
    %v117 = vunpack.c.l.b16 %v69
    %v118 = vunpack.c.l.b16 %v70
    %v119 = vunpack.c.l.b16 %v71
    %v120 = vunpack.c.l.b16 %v72
    %v121 = vunpack.c.l.b16 %v73
    %v122 = vunpack.c.l.b16 %v74
    %v123 = vunpack.c.l.b16 %v75
    %v124 = vunpack.c.l.b16 %v76
    %v125 = vunpack.c.l.b16 %v77
    %v126 = vunpack.c.l.b16 %v78
    %v127 = vunpack.c.l.b16 %v79
    %v128 = vunpack.c.l.b16 %v80
    %v129 = vunpack.c.l.b16 %v81
    %v130 = vpack.c.b16 %v115, %v114
    %v131 = vpack.c.b16 %v117, %v116
    %v132 = vpack.c.b16 %v119, %v118
    %v133 = vpack.c.b16 %v121, %v120
    %v134 = vpack.c.b16 %v123, %v122
    %v135 = vpack.c.b16 %v125, %v124
    %v136 = vpack.c.b16 %v127, %v126
    %v137 = vpack.c.b16 %v129, %v128
    %v162 = vunpack.c.l.b16 %v82
    %v163 = vunpack.c.l.b16 %v83
    %v164 = vunpack.c.l.b16 %v84
    %v165 = vunpack.c.l.b16 %v85
    %v166 = vunpack.c.l.b16 %v86
    %v167 = vunpack.c.l.b16 %v87
    %v168 = vunpack.c.l.b16 %v88
    %v169 = vunpack.c.l.b16 %v89
    %v170 = vunpack.c.l.b16 %v90
    %v171 = vunpack.c.l.b16 %v91
    %v172 = vunpack.c.l.b16 %v92
    %v173 = vunpack.c.l.b16 %v93
    %v174 = vunpack.c.l.b16 %v94
    %v175 = vunpack.c.l.b16 %v95
    %v176 = vunpack.c.l.b16 %v96
    %v177 = vunpack.c.l.b16 %v97
    %v178 = vpack.c.b16 %v163, %v162
    %v179 = vpack.c.b16 %v165, %v164
    %v180 = vpack.c.b16 %v167, %v166
    %v181 = vpack.c.b16 %v169, %v168
    %v182 = vpack.c.b16 %v171, %v170
    %v183 = vpack.c.b16 %v173, %v172
    %v184 = vpack.c.b16 %v175, %v174
    %v185 = vpack.c.b16 %v177, %v176
    %194 = vmatpush.bf16.msra.mxu0 %v185
    %195 = vmatpush.bf16.msra.mxu0 %v184
    %196 = vmatpush.bf16.msra.mxu0 %v183
    %197 = vmatpush.bf16.msra.mxu0 %v182
    %198 = vmatpush.bf16.msra.mxu0 %v181
    %199 = vmatpush.bf16.msra.mxu0 %v180
    %200 = vmatpush.bf16.msra.mxu0 %v179
    %201 = vmatpush.bf16.msra.mxu0 %v178
    %202 = vmatmul.bf16.gmra.mxu0 %v130
    %v203 = vpop.f32.mrf.mxu0
    %v204 = vadd.f32 0.0, %v203
    %v205 = vpop.f32.mrf.mxu0
    %v206 = vadd.f32 0.0, %v205
    %207 = vmatmul.bf16.gmra.mxu0 %v131
    %v208 = vpop.f32.mrf.mxu0
    %v209 = vadd.f32 0.0, %v208
    %v210 = vpop.f32.mrf.mxu0
    %v211 = vadd.f32 0.0, %v210
    %212 = vmatmul.bf16.gmra.mxu0 %v132
    %v213 = vpop.f32.mrf.mxu0
    %v214 = vadd.f32 0.0, %v213
    %v215 = vpop.f32.mrf.mxu0
    %v216 = vadd.f32 0.0, %v215
    %217 = vmatmul.bf16.gmra.mxu0 %v133
    %v218 = vpop.f32.mrf.mxu0
    %v219 = vadd.f32 0.0, %v218
    %v220 = vpop.f32.mrf.mxu0
    %v221 = vadd.f32 0.0, %v220
    %222 = vmatmul.bf16.gmra.mxu0 %v134
    %v223 = vpop.f32.mrf.mxu0
    %v224 = vadd.f32 0.0, %v223
    %v225 = vpop.f32.mrf.mxu0
    %v226 = vadd.f32 0.0, %v225
    %227 = vmatmul.bf16.gmra.mxu0 %v135
    %v228 = vpop.f32.mrf.mxu0
    %v229 = vadd.f32 0.0, %v228
    %v230 = vpop.f32.mrf.mxu0
    %v231 = vadd.f32 0.0, %v230
    %232 = vmatmul.bf16.gmra.mxu0 %v136
    %v233 = vpop.f32.mrf.mxu0
    %v234 = vadd.f32 0.0, %v233
    %v235 = vpop.f32.mrf.mxu0
    %v236 = vadd.f32 0.0, %v235
    %237 = vmatmul.bf16.gmra.mxu0 %v137
    %v238 = vpop.f32.mrf.mxu0
    %v239 = vadd.f32 0.0, %v238
    %v240 = vpop.f32.mrf.mxu0
    %v241 = vadd.f32 0.0, %v240
    %242 = vdwg.mxu0
    %v243 = vpack.c.bf16 %v204, %v204
    %v244 = vpack.c.bf16 %v206, %v206
    %v245 = vpack.c.bf16 %v209, %v209
    %v246 = vpack.c.bf16 %v211, %v211
    %v247 = vpack.c.bf16 %v214, %v214
    %v248 = vpack.c.bf16 %v216, %v216
    %v249 = vpack.c.bf16 %v219, %v219
    %v250 = vpack.c.bf16 %v221, %v221
    %v251 = vpack.c.bf16 %v224, %v224
    %v252 = vpack.c.bf16 %v226, %v226
    %v253 = vpack.c.bf16 %v229, %v229
    %v254 = vpack.c.bf16 %v231, %v231
    %v255 = vpack.c.bf16 %v234, %v234
    %v256 = vpack.c.bf16 %v236, %v236
    %v257 = vpack.c.bf16 %v239, %v239
    %v258 = vpack.c.bf16 %v241, %v241
    %259 = vst [vmem:[#allocation8] sm:$0xf] %v243
    %260 = vst [vmem:[#allocation8 + $0x4] sm:$0xf] %v244
    %261 = vst [vmem:[#allocation8 + $0x8] sm:$0xf] %v245
    %262 = vst [vmem:[#allocation8 + $0xc] sm:$0xf] %v246
    %263 = vst [vmem:[#allocation8 + $0x10] sm:$0xf] %v247
    %264 = vst [vmem:[#allocation8 + $0x14] sm:$0xf] %v248
    %265 = vst [vmem:[#allocation8 + $0x18] sm:$0xf] %v249
    %266 = vst [vmem:[#allocation8 + $0x1c] sm:$0xf] %v250
    %267 = vst [vmem:[#allocation8 + $0x20] sm:$0xf] %v251
    %268 = vst [vmem:[#allocation8 + $0x24] sm:$0xf] %v252
    %269 = vst [vmem:[#allocation8 + $0x28] sm:$0xf] %v253
    %270 = vst [vmem:[#allocation8 + $0x2c] sm:$0xf] %v254
    %271 = vst [vmem:[#allocation8 + $0x30] sm:$0xf] %v255
    %272 = vst [vmem:[#allocation8 + $0x34] sm:$0xf] %v256
    %273 = vst [vmem:[#allocation8 + $0x38] sm:$0xf] %v257
    %274 = vst [vmem:[#allocation8 + $0x3c] sm:$0xf] %v258
    %v275 = vld [vmem:[#allocation7] sm:$0xf]
    %v276 = vld [vmem:[#allocation7 + $0x4] sm:$0xf]
    %v277 = vld [vmem:[#allocation7 + $0x8] sm:$0xf]
    %v278 = vld [vmem:[#allocation7 + $0xc] sm:$0xf]
    %v279 = vld [vmem:[#allocation7 + $0x10] sm:$0xf]
    %v280 = vld [vmem:[#allocation7 + $0x14] sm:$0xf]
    %v281 = vld [vmem:[#allocation7 + $0x18] sm:$0xf]
    %v282 = vld [vmem:[#allocation7 + $0x1c] sm:$0xf]
    %v283 = vld [vmem:[#allocation7 + $0x20] sm:$0xf]
    %v284 = vld [vmem:[#allocation7 + $0x24] sm:$0xf]
    %v285 = vld [vmem:[#allocation7 + $0x28] sm:$0xf]
    %v286 = vld [vmem:[#allocation7 + $0x2c] sm:$0xf]
    %v287 = vld [vmem:[#allocation7 + $0x30] sm:$0xf]
    %v288 = vld [vmem:[#allocation7 + $0x34] sm:$0xf]
    %v289 = vld [vmem:[#allocation7 + $0x38] sm:$0xf]
    %v290 = vld [vmem:[#allocation7 + $0x3c] sm:$0xf]
    %v307 = vunpack.c.l.b16 %v243
    %v308 = vunpack.c.l.b16 %v244
    %v309 = vunpack.c.l.b16 %v245
    %v310 = vunpack.c.l.b16 %v246
    %v311 = vunpack.c.l.b16 %v247
    %v312 = vunpack.c.l.b16 %v248
    %v313 = vunpack.c.l.b16 %v249
    %v314 = vunpack.c.l.b16 %v250
    %v315 = vunpack.c.l.b16 %v251
    %v316 = vunpack.c.l.b16 %v252
    %v317 = vunpack.c.l.b16 %v253
    %v318 = vunpack.c.l.b16 %v254
    %v319 = vunpack.c.l.b16 %v255
    %v320 = vunpack.c.l.b16 %v256
    %v321 = vunpack.c.l.b16 %v257
    %v322 = vunpack.c.l.b16 %v258
    %v323 = vpack.c.b16 %v308, %v307
    %v324 = vpack.c.b16 %v310, %v309
    %v325 = vpack.c.b16 %v312, %v311
    %v326 = vpack.c.b16 %v314, %v313
    %v327 = vpack.c.b16 %v316, %v315
    %v328 = vpack.c.b16 %v318, %v317
    %v329 = vpack.c.b16 %v320, %v319
    %v330 = vpack.c.b16 %v322, %v321
    %v355 = vunpack.c.l.b16 %v275
    %v356 = vunpack.c.l.b16 %v276
    %v357 = vunpack.c.l.b16 %v277
    %v358 = vunpack.c.l.b16 %v278
    %v359 = vunpack.c.l.b16 %v279
    %v360 = vunpack.c.l.b16 %v280
    %v361 = vunpack.c.l.b16 %v281
    %v362 = vunpack.c.l.b16 %v282
    %v363 = vunpack.c.l.b16 %v283
    %v364 = vunpack.c.l.b16 %v284
    %v365 = vunpack.c.l.b16 %v285
    %v366 = vunpack.c.l.b16 %v286
    %v367 = vunpack.c.l.b16 %v287
    %v368 = vunpack.c.l.b16 %v288
    %v369 = vunpack.c.l.b16 %v289
    %v370 = vunpack.c.l.b16 %v290
    %v371 = vpack.c.b16 %v356, %v355
    %v372 = vpack.c.b16 %v358, %v357
    %v373 = vpack.c.b16 %v360, %v359
    %v374 = vpack.c.b16 %v362, %v361
    %v375 = vpack.c.b16 %v364, %v363
    %v376 = vpack.c.b16 %v366, %v365
    %v377 = vpack.c.b16 %v368, %v367
    %v378 = vpack.c.b16 %v370, %v369
    %387 = vmatpush.bf16.msra.mxu0 %v378
    %388 = vmatpush.bf16.msra.mxu0 %v377
    %389 = vmatpush.bf16.msra.mxu0 %v376
    %390 = vmatpush.bf16.msra.mxu0 %v375
    %391 = vmatpush.bf16.msra.mxu0 %v374
    %392 = vmatpush.bf16.msra.mxu0 %v373
    %393 = vmatpush.bf16.msra.mxu0 %v372
    %394 = vmatpush.bf16.msra.mxu0 %v371
    %395 = vmatmul.bf16.gmra.mxu0 %v323
    %v396 = vpop.f32.mrf.mxu0
    %v397 = vadd.f32 0.0, %v396
    %v398 = vpop.f32.mrf.mxu0
    %v399 = vadd.f32 0.0, %v398
    %400 = vmatmul.bf16.gmra.mxu0 %v324
    %v401 = vpop.f32.mrf.mxu0
    %v402 = vadd.f32 0.0, %v401
    %v403 = vpop.f32.mrf.mxu0
    %v404 = vadd.f32 0.0, %v403
    %405 = vmatmul.bf16.gmra.mxu0 %v325
    %v406 = vpop.f32.mrf.mxu0
    %v407 = vadd.f32 0.0, %v406
    %v408 = vpop.f32.mrf.mxu0
    %v409 = vadd.f32 0.0, %v408
    %410 = vmatmul.bf16.gmra.mxu0 %v326
    %v411 = vpop.f32.mrf.mxu0
    %v412 = vadd.f32 0.0, %v411
    %v413 = vpop.f32.mrf.mxu0
    %v414 = vadd.f32 0.0, %v413
    %415 = vmatmul.bf16.gmra.mxu0 %v327
    %v416 = vpop.f32.mrf.mxu0
    %v417 = vadd.f32 0.0, %v416
    %v418 = vpop.f32.mrf.mxu0
    %v419 = vadd.f32 0.0, %v418
    %420 = vmatmul.bf16.gmra.mxu0 %v328
    %v421 = vpop.f32.mrf.mxu0
    %v422 = vadd.f32 0.0, %v421
    %v423 = vpop.f32.mrf.mxu0
    %v424 = vadd.f32 0.0, %v423
    %425 = vmatmul.bf16.gmra.mxu0 %v329
    %v426 = vpop.f32.mrf.mxu0
    %v427 = vadd.f32 0.0, %v426
    %v428 = vpop.f32.mrf.mxu0
    %v429 = vadd.f32 0.0, %v428
    %430 = vmatmul.bf16.gmra.mxu0 %v330
    %v431 = vpop.f32.mrf.mxu0
    %v432 = vadd.f32 0.0, %v431
    %v433 = vpop.f32.mrf.mxu0
    %v434 = vadd.f32 0.0, %v433
    %435 = vdwg.mxu0
    %436 = vst [vmem:[#allocation9] sm:$0xff] %v397
    %437 = vst [vmem:[#allocation9 + $0x8] sm:$0xff] %v399
    %438 = vst [vmem:[#allocation9 + $0x10] sm:$0xff] %v402
    %439 = vst [vmem:[#allocation9 + $0x18] sm:$0xff] %v404
    %440 = vst [vmem:[#allocation9 + $0x20] sm:$0xff] %v407
    %441 = vst [vmem:[#allocation9 + $0x28] sm:$0xff] %v409
    %442 = vst [vmem:[#allocation9 + $0x30] sm:$0xff] %v412
    %443 = vst [vmem:[#allocation9 + $0x38] sm:$0xff] %v414
    %444 = vst [vmem:[#allocation9 + $0x40] sm:$0xff] %v417
    %445 = vst [vmem:[#allocation9 + $0x48] sm:$0xff] %v419
    %446 = vst [vmem:[#allocation9 + $0x50] sm:$0xff] %v422
    %447 = vst [vmem:[#allocation9 + $0x58] sm:$0xff] %v424
    %448 = vst [vmem:[#allocation9 + $0x60] sm:$0xff] %v427
    %449 = vst [vmem:[#allocation9 + $0x68] sm:$0xff] %v429
    %450 = vst [vmem:[#allocation9 + $0x70] sm:$0xff] %v432
    %451 = vst [vmem:[#allocation9 + $0x78] sm:$0xff] %v434
    %452 = vxpose.xlu0.b32.start [1/16] %v397, 128
    %453 = vxpose.xlu0.b32.cont [2/16] %v399, 128
    %454 = vxpose.xlu0.b32.cont [3/16] %v402, 128
    %455 = vxpose.xlu0.b32.cont [4/16] %v404, 128
    %456 = vxpose.xlu0.b32.cont [5/16] %v407, 128
    %457 = vxpose.xlu0.b32.cont [6/16] %v409, 128
    %458 = vxpose.xlu0.b32.cont [7/16] %v412, 128
    %459 = vxpose.xlu0.b32.cont [8/16] %v414, 128
    %460 = vxpose.xlu0.b32.cont [9/16] %v417, 128
    %461 = vxpose.xlu0.b32.cont [10/16] %v419, 128
    %462 = vxpose.xlu0.b32.cont [11/16] %v422, 128
    %463 = vxpose.xlu0.b32.cont [12/16] %v424, 128
    %464 = vxpose.xlu0.b32.cont [13/16] %v427, 128
    %465 = vxpose.xlu0.b32.cont [14/16] %v429, 128
    %466 = vxpose.xlu0.b32.cont [15/16] %v432, 128
    %467 = vxpose.xlu0.b32.end [16/16] %v434, 128
    %v468 = vpop.trf.xlu0
    %v469 = vpop.trf.xlu0
    %v470 = vpop.trf.xlu0
    %v471 = vpop.trf.xlu0
    %v472 = vpop.trf.xlu0
    %v473 = vpop.trf.xlu0
    %v474 = vpop.trf.xlu0
    %v475 = vpop.trf.xlu0
    %v476 = vpop.trf.xlu0
    %v477 = vpop.trf.xlu0
    %v478 = vpop.trf.xlu0
    %v479 = vpop.trf.xlu0
    %v480 = vpop.trf.xlu0
    %v481 = vpop.trf.xlu0
    %v482 = vpop.trf.xlu0
    %v483 = vpop.trf.xlu0
    %484 = vst [vmem:[#allocation11] sm:$0xff] %v468
    // Predicated region
    $region26: #{tpu_custom_call.1} parent=1 // pred_check
      _
    $region27: #{tpu_custom_call.1} parent=1 // pred_check_branch
      %486 = sbr.rel (0) target = $region29
    $region28: #{tpu_custom_call.1} parent=1 // pred_region
      %488 = vsyncadd [#allocation4], 0
      %s489 = sshll.u32 [#allocation8], 4
      %s490 = int_to_ptr.vmem [resolvable:$true] %s489
      %s491 = sshll.u32 %s3, 4
      %s492 = int_to_ptr.hbm [resolvable:$true] %s491
      %497 = dma.vmem_to_hbm [thread:$0]  %s490, 1024, %s492, [#allocation4], 64, 64, 4
    $region29: #{tpu_custom_call.1} parent=1 // pred_fallthru
      _
    // Predicated region
    $region30: #{tpu_custom_call.1} parent=1 // pred_check
      _
    $region31: #{tpu_custom_call.1} parent=1 // pred_check_branch
      %499 = sbr.rel (0) target = $region33
    $region32: #{tpu_custom_call.1} parent=1 // pred_region
      %501 = vsyncadd [#allocation10], 0
      %s502 = sshll.u32 [#allocation9], 4
      %s503 = int_to_ptr.vmem [resolvable:$true] %s502
      %s504 = sshll.u32 %s4, 4
      %s505 = int_to_ptr.hbm [resolvable:$true] %s504
      %510 = dma.vmem_to_hbm [thread:$0]  %s503, 2048, %s505, [#allocation10], 128, 128, 8
    $region33: #{tpu_custom_call.1} parent=1 // pred_fallthru
      _
    // Predicated region
    $region34: #{tpu_custom_call.1} parent=1 // pred_check
      _
    $region35: #{tpu_custom_call.1} parent=1 // pred_check_branch
      %512 = sbr.rel (0) target = $region37
    $region36: #{tpu_custom_call.1} parent=1 // pred_region
      %514 = vsyncadd [#allocation10], 0
      %s516 = sshll.u32 [#allocation11], 4
      %s517 = int_to_ptr.vmem [resolvable:$true] %s516
      %s518 = sshll.u32 %s5, 4
      %s519 = int_to_ptr.hbm [resolvable:$true] %s518
      %521 = dma.vmem_to_hbm [thread:$0]  %s517, 128, %s519, [#allocation10]
    $region37: #{tpu_custom_call.1} parent=1 // pred_fallthru
      _
    // Predicated region
    $region38: #{tpu_custom_call.1} parent=1 // pred_check
      _
    $region39: #{tpu_custom_call.1} parent=1 // pred_check_branch
      %523 = sbr.rel (0) target = $region41
    $region40: #{tpu_custom_call.1} parent=1 // pred_region
      %525 = dma.done [#allocation4], 1024
    $region41: #{tpu_custom_call.1} parent=1 // pred_fallthru
      _
    // Predicated region
    $region42: #{tpu_custom_call.1} parent=1 // pred_check
      _
    $region43: #{tpu_custom_call.1} parent=1 // pred_check_branch
      %527 = sbr.rel (0) target = $region45
    $region44: #{tpu_custom_call.1} parent=1 // pred_region
      %529 = dma.done [#allocation10], 2048
    $region45: #{tpu_custom_call.1} parent=1 // pred_fallthru
      _
    // Predicated region
    $region46: #{tpu_custom_call.1} parent=1 // pred_check
      _
    $region47: #{tpu_custom_call.1} parent=1 // pred_check_branch
      %531 = sbr.rel (0) target = $region49
    $region48: #{tpu_custom_call.1} parent=1 // pred_region
      %533 = dma.done [#allocation10], 128
    $region49: #{tpu_custom_call.1} parent=1 // pred_fallthru
      _
    %534 = vsyncpa [#allocation3], 1
    %535 = vsyncpa [#allocation6], 1
    %536 = vsyncpa [#allocation4], 1
    %537 = vsyncpa [#allocation10], 1

</llo_original>
